<compile_context>
chip_gen: v7x
topology: tpu7x:2x2x1
jax: 0.10.0
libtpu: 0.0.40
codegen_flags: <defaults>
</compile_context>

<pallas_src>
import functools

import jax
import jax.numpy as jnp
from jax.experimental import pallas as pl
from jax.experimental.pallas import tpu as pltpu

LANE = 128


def _round_up(x, m):
    return ((x + m - 1) // m) * m


def mlp_kernel(x_ref, w1_ref, b1_ref, w2_ref, b2_ref, w3_ref, b3_ref, o_ref):
    # x tile: (block_b, in_features) f32 -> cast to bf16 here (spare VPU slot)
    # instead of a separate HBM-touching XLA op in the wrapper.
    x = x_ref[...].astype(jnp.bfloat16)

    h1 = jnp.dot(x, w1_ref[...], preferred_element_type=jnp.float32) + b1_ref[...]
    h1 = jnp.maximum(h1, 0.0)

    h2 = jnp.dot(h1.astype(jnp.bfloat16), w2_ref[...],
                 preferred_element_type=jnp.float32) + b2_ref[...]
    h2 = jnp.maximum(h2, 0.0)

    # fc3 has a single output feature: VPU multiply + XLU lane reduction
    # (f32 throughout), then sigmoid only on the real logit column.
    logit = jnp.sum(h2 * w3_ref[...], axis=-1, keepdims=True) + b3_ref[...]
    o_ref[...] = jax.nn.sigmoid(logit)


def _resident_spec(shape):
    # Constant block index across the batch grid -> weights/biases stay in
    # VMEM; single-buffer them so large hidden sizes don't double the
    # footprint (matters on v7x's 64 MiB VMEM).
    index_map = lambda i: (0,) * len(shape)
    try:
        return pl.BlockSpec(shape, index_map, pipeline_mode=pl.Buffered(1))
    except Exception:  # older jax without pipeline_mode / Buffered
        return pl.BlockSpec(shape, index_map)


@functools.partial(jax.jit, static_argnames=("max_block_b",))
def neural_net_forward(x, params, *, max_block_b=1024):
    """x: (batch, input_size) f32. params: (w1, b1, w2, b2, w3, b3) with
    weights stored (in_features, out_features) so y = x @ W + b matches
    nn.Linear. Returns (batch, 1) f32 sigmoid outputs."""
    w1, b1, w2, b2, w3, b3 = params
    batch, in_features = x.shape
    hidden = w1.shape[1]
    hid_p = _round_up(hidden, LANE)

    # Pad the *hidden* dims of the tiny resident weights once (zero padding is
    # numerically exact: padded activations stay 0 through ReLU and contribute
    # nothing to the final reduction). x is NOT padded/cast in the wrapper.
    w1p = jnp.pad(w1, ((0, 0), (0, hid_p - hidden))).astype(jnp.bfloat16)
    w2p = jnp.pad(w2, ((0, hid_p - hidden), (0, hid_p - hidden))).astype(jnp.bfloat16)
    b1p = jnp.pad(b1.reshape(1, hidden), ((0, 0), (0, hid_p - hidden))).astype(jnp.float32)
    b2p = jnp.pad(b2.reshape(1, hidden), ((0, 0), (0, hid_p - hidden))).astype(jnp.float32)
    w3r = jnp.pad(w3.reshape(hidden, 1).T, ((0, 0), (0, hid_p - hidden))).astype(jnp.float32)
    b3p = b3.reshape(1, 1).astype(jnp.float32)

    # Batch tiling: block_b multiple of 8, divides batch_p (waste <= steps*8
    # rows), and batches >= 512 get >= 2 steps so v7x megacore is used.
    batch_p = _round_up(batch, 8)
    num_steps = pl.cdiv(batch_p, max_block_b)
    if batch_p >= 512:
        num_steps = max(num_steps, 2)
    block_b = _round_up(pl.cdiv(batch_p, num_steps), 8)
    batch_p = block_b * num_steps

    xp = x if batch_p == batch else jnp.pad(x, ((0, batch_p - batch), (0, 0)))

    # Tight VMEM budget: single-buffered weights, double-buffered x/out tiles
    # (allocations lane-padded to 128), f32 intermediates, + headroom.
    in_lanes = _round_up(in_features, LANE)
    vmem_bytes = int(
        (in_features * hid_p + hid_p * hid_p) * 2      # bf16 resident weights
        + (3 * hid_p + LANE) * 4                        # f32 biases + fc3 row
        + 2 * block_b * in_lanes * 4                    # x tiles (double-buffered)
        + 2 * block_b * LANE * 4                        # out tiles (double-buffered)
        + 4 * block_b * hid_p * 4                       # f32 intermediates
        + (16 << 20)                                    # headroom
    )

    out = pl.pallas_call(
        mlp_kernel,
        out_shape=jax.ShapeDtypeStruct((batch_p, 1), jnp.float32),
        grid=(num_steps,),
        in_specs=[
            pl.BlockSpec((block_b, in_features), lambda i: (i, 0)),
            _resident_spec((in_features, hid_p)),
            _resident_spec((1, hid_p)),
            _resident_spec((hid_p, hid_p)),
            _resident_spec((1, hid_p)),
            _resident_spec((1, hid_p)),
            _resident_spec((1, 1)),
        ],
        out_specs=pl.BlockSpec((block_b, 1), lambda i: (i, 0)),
        compiler_params=pltpu.CompilerParams(
            dimension_semantics=("parallel",),
            vmem_limit_bytes=vmem_bytes,
        ),
    )(xp, w1p, b1p, w2p, b2p, w3r, b3p)

    return out if batch_p == batch else out[:batch]


def init_params(key, input_size, hidden_units):
    # Deterministic init mimicking nn.Linear's uniform(-1/sqrt(fan_in), 1/sqrt(fan_in)).
    ks = jax.random.split(key, 6)

    def linear(kw, kb, fan_in, fan_out):
        bound = 1.0 / jnp.sqrt(fan_in)
        w = jax.random.uniform(kw, (fan_in, fan_out), jnp.float32, -bound, bound)
        b = jax.random.uniform(kb, (1, fan_out), jnp.float32, -bound, bound)
        return w, b

    w1, b1 = linear(ks[0], ks[1], input_size, hidden_units)
    w2, b2 = linear(ks[2], ks[3], hidden_units, hidden_units)
    w3, b3 = linear(ks[4], ks[5], hidden_units, 1)
    return w1, b1, w2, b2, w3, b3


if __name__ == "__main__":
    input_size = 32
    hidden_units = 32
    batch = 8

    key = jax.random.PRNGKey(0)
    k_x, k_p = jax.random.split(key)

    x = jax.random.normal(k_x, (batch, input_size), dtype=jnp.float32)
    params = init_params(k_p, input_size, hidden_units)

    out = neural_net_forward(x, params)
    jax.block_until_ready(out)

    # Pure-JAX f32 reference (same semantics as the PyTorch forward).
    # Tolerance loosened because the first two matmuls use bf16 MXU operands.
    w1, b1, w2, b2, w3, b3 = params
    h1 = jnp.maximum(x @ w1 + b1, 0.0)
    h2 = jnp.maximum(h1 @ w2 + b2, 0.0)
    ref = jax.nn.sigmoid(h2 @ w3 + b3)

    assert out.shape == (batch, 1)
    assert jnp.allclose(out, ref, atol=2e-2), "mismatch vs reference"

    print("KERNEL_OK")
</pallas_src>

<mosaic_0001>
module attributes {stable_mosaic.version = 11 : i64} {
  func.func @mlp_kernel(%arg0: i32, %arg1: memref<8x32xf32, #tpu.memory_space<vmem>>, %arg2: memref<32x128xbf16, #tpu.memory_space<vmem>>, %arg3: memref<1x128xf32, #tpu.memory_space<vmem>>, %arg4: memref<128x128xbf16, #tpu.memory_space<vmem>>, %arg5: memref<1x128xf32, #tpu.memory_space<vmem>>, %arg6: memref<1x128xf32, #tpu.memory_space<vmem>>, %arg7: memref<1x1xf32, #tpu.memory_space<vmem>>, %arg8: memref<8x1xf32, #tpu.memory_space<vmem>>) attributes {dimension_semantics = [#tpu.dimension_semantics<parallel>], iteration_bounds = array<i64: 1>, scalar_prefetch = 0 : i64, scratch_operands = 0 : i64, tpu.core_type = #tpu.core_type<tc>, window_params = [{transform_indices = @transform_0, window_bounds = array<i64: 8, 32>}, {pipeline_mode = #tpu.pipeline_mode<synchronous>, transform_indices = @transform_1, window_bounds = array<i64: 32, 128>}, {pipeline_mode = #tpu.pipeline_mode<synchronous>, transform_indices = @transform_2, window_bounds = array<i64: 1, 128>}, {pipeline_mode = #tpu.pipeline_mode<synchronous>, transform_indices = @transform_3, window_bounds = array<i64: 128, 128>}, {pipeline_mode = #tpu.pipeline_mode<synchronous>, transform_indices = @transform_4, window_bounds = array<i64: 1, 128>}, {pipeline_mode = #tpu.pipeline_mode<synchronous>, transform_indices = @transform_5, window_bounds = array<i64: 1, 128>}, {pipeline_mode = #tpu.pipeline_mode<synchronous>, transform_indices = @transform_6, window_bounds = array<i64: 1, 1>}, {transform_indices = @transform_7, window_bounds = array<i64: 8, 1>}]} {
    %c0 = arith.constant 0 : index
    %c0_0 = arith.constant 0 : index
    %0 = vector.load %arg1[%c0, %c0_0] : memref<8x32xf32, #tpu.memory_space<vmem>>, vector<8x32xf32>
    %1 = arith.truncf %0 : vector<8x32xf32> to vector<8x32xbf16>
    %c0_1 = arith.constant 0 : index
    %c0_2 = arith.constant 0 : index
    %2 = vector.load %arg2[%c0_1, %c0_2] : memref<32x128xbf16, #tpu.memory_space<vmem>>, vector<32x128xbf16>
    %cst = arith.constant dense<0.000000e+00> : vector<8x128xf32>
    %3 = tpu.matmul %1, %2, %cst {dimension_numbers = #tpu.dot_dimension_numbers<[1], [0], [0], [1], [0, 0, 1, 1], [], []>} : vector<8x32xbf16>, vector<32x128xbf16>, vector<8x128xf32> -> vector<8x128xf32>
    %c0_3 = arith.constant 0 : index
    %c0_4 = arith.constant 0 : index
    %4 = vector.load %arg3[%c0_3, %c0_4] : memref<1x128xf32, #tpu.memory_space<vmem>>, vector<1x128xf32>
    %5 = vector.broadcast %4 : vector<1x128xf32> to vector<8x128xf32>
    %6 = arith.addf %3, %5 : vector<8x128xf32>
    %cst_5 = arith.constant 0.000000e+00 : f32
    %7 = vector.broadcast %cst_5 : f32 to vector<8x128xf32>
    %8 = arith.maximumf %6, %7 : vector<8x128xf32>
    %9 = arith.truncf %8 : vector<8x128xf32> to vector<8x128xbf16>
    %c0_6 = arith.constant 0 : index
    %c0_7 = arith.constant 0 : index
    %10 = vector.load %arg4[%c0_6, %c0_7] : memref<128x128xbf16, #tpu.memory_space<vmem>>, vector<128x128xbf16>
    %cst_8 = arith.constant dense<0.000000e+00> : vector<8x128xf32>
    %11 = tpu.matmul %9, %10, %cst_8 {dimension_numbers = #tpu.dot_dimension_numbers<[1], [0], [0], [1], [0, 0, 1, 1], [], []>} : vector<8x128xbf16>, vector<128x128xbf16>, vector<8x128xf32> -> vector<8x128xf32>
    %c0_9 = arith.constant 0 : index
    %c0_10 = arith.constant 0 : index
    %12 = vector.load %arg5[%c0_9, %c0_10] : memref<1x128xf32, #tpu.memory_space<vmem>>, vector<1x128xf32>
    %13 = vector.broadcast %12 : vector<1x128xf32> to vector<8x128xf32>
    %14 = arith.addf %11, %13 : vector<8x128xf32>
    %cst_11 = arith.constant 0.000000e+00 : f32
    %15 = vector.broadcast %cst_11 : f32 to vector<8x128xf32>
    %16 = arith.maximumf %14, %15 : vector<8x128xf32>
    %c0_12 = arith.constant 0 : index
    %c0_13 = arith.constant 0 : index
    %17 = vector.load %arg6[%c0_12, %c0_13] : memref<1x128xf32, #tpu.memory_space<vmem>>, vector<1x128xf32>
    %18 = vector.broadcast %17 : vector<1x128xf32> to vector<8x128xf32>
    %19 = arith.mulf %16, %18 : vector<8x128xf32>
    %cst_14 = arith.constant dense<0.000000e+00> : vector<8xf32>
    %20 = vector.multi_reduction <add>, %19, %cst_14 [1] : vector<8x128xf32> to vector<8xf32>
    %21 = vector.shape_cast %20 : vector<8xf32> to vector<8x1xf32>
    %c0_15 = arith.constant 0 : index
    %c0_16 = arith.constant 0 : index
    %22 = vector.load %arg7[%c0_15, %c0_16] : memref<1x1xf32, #tpu.memory_space<vmem>>, vector<1x1xf32>
    %23 = vector.broadcast %22 : vector<1x1xf32> to vector<8x1xf32>
    %24 = arith.addf %21, %23 : vector<8x1xf32>
    %25 = arith.negf %24 : vector<8x1xf32>
    %26 = math.exp %25 : vector<8x1xf32>
    %cst_17 = arith.constant 1.000000e+00 : f32
    %27 = vector.broadcast %cst_17 : f32 to vector<8x1xf32>
    %28 = arith.addf %27, %26 : vector<8x1xf32>
    %29 = arith.divf %27, %28 : vector<8x1xf32>
    %c0_18 = arith.constant 0 : index
    %c0_19 = arith.constant 0 : index
    %30 = vector.load %arg8[%c0_18, %c0_19] : memref<8x1xf32, #tpu.memory_space<vmem>>, vector<8x1xf32>
    tpu.vector_store %arg8[%c0_18, %c0_19], %29 {strides = array<i32>} : memref<8x1xf32, #tpu.memory_space<vmem>>, vector<8x1xf32>,
    return
  }
  func.func @transform_0(%arg0: i32) -> (i32, i32) {
    %c0_i32 = arith.constant 0 : i32
    %c0_i32_0 = arith.constant 0 : i32
    return %arg0, %c0_i32 : i32, i32
  }
  func.func @transform_1(%arg0: i32) -> (i32, i32) {
    %c0_i32 = arith.constant 0 : i32
    %c0_i32_0 = arith.constant 0 : i32
    %c0_i32_1 = arith.constant 0 : i32
    return %c0_i32, %c0_i32_0 : i32, i32
  }
  func.func @transform_2(%arg0: i32) -> (i32, i32) {
    %c0_i32 = arith.constant 0 : i32
    %c0_i32_0 = arith.constant 0 : i32
    %c0_i32_1 = arith.constant 0 : i32
    return %c0_i32, %c0_i32_0 : i32, i32
  }
  func.func @transform_3(%arg0: i32) -> (i32, i32) {
    %c0_i32 = arith.constant 0 : i32
    %c0_i32_0 = arith.constant 0 : i32
    %c0_i32_1 = arith.constant 0 : i32
    return %c0_i32, %c0_i32_0 : i32, i32
  }
  func.func @transform_4(%arg0: i32) -> (i32, i32) {
    %c0_i32 = arith.constant 0 : i32
    %c0_i32_0 = arith.constant 0 : i32
    %c0_i32_1 = arith.constant 0 : i32
    return %c0_i32, %c0_i32_0 : i32, i32
  }
  func.func @transform_5(%arg0: i32) -> (i32, i32) {
    %c0_i32 = arith.constant 0 : i32
    %c0_i32_0 = arith.constant 0 : i32
    %c0_i32_1 = arith.constant 0 : i32
    return %c0_i32, %c0_i32_0 : i32, i32
  }
  func.func @transform_6(%arg0: i32) -> (i32, i32) {
    %c0_i32 = arith.constant 0 : i32
    %c0_i32_0 = arith.constant 0 : i32
    %c0_i32_1 = arith.constant 0 : i32
    return %c0_i32, %c0_i32_0 : i32, i32
  }
  func.func @transform_7(%arg0: i32) -> (i32, i32) {
    %c0_i32 = arith.constant 0 : i32
    %c0_i32_0 = arith.constant 0 : i32
    return %arg0, %c0_i32 : i32, i32
  }
}

</mosaic_0001>

<llo_original>
// kernel: neural_net_forward.1
$region0: #{neural_net_forward.1}
  #allocation0 [shape = 'u32[]', space=smem, size = 0x4, offset = 0x4, fixed_abs, tag = 'smem constant byte address 0x4 - core index']
  #allocation1 [shape = 'u32[144,128]{1,0:T(1,128)}', space=vmem, size = 0x12000, scoped, tag = 'internal scratch']
  #allocation2 [shape = 'f32[1,1]{1,0:T(1,128)S(1)}', space=vmem, size = 0x200, scoped, tag = 'scoped memory for neural_net_forward.1']
  %s0 = inlined_call_operand.vmem [shape: f32[8,32], index: 0, kind: input, shape index: {}]
  %s1 = inlined_call_operand.vmem [shape: bf16[32,128], index: 1, kind: input, shape index: {}]
  %s2 = inlined_call_operand.vmem [shape: f32[1,128], index: 2, kind: input, shape index: {}]
  %s3 = inlined_call_operand.vmem [shape: bf16[128,128], index: 3, kind: input, shape index: {}]
  %s4 = inlined_call_operand.vmem [shape: f32[1,128], index: 4, kind: input, shape index: {}]
  %s5 = inlined_call_operand.vmem [shape: f32[1,128], index: 5, kind: input, shape index: {}]
  %s6 = inlined_call_operand.<no memory space> [shape: f32[1,1], index: 6, kind: input, shape index: {}]
  %s7 = inlined_call_operand.vmem [shape: f32[8,1], index: 7, kind: output, shape index: {}]
  %s8 = sld [smem:[#allocation0]]
  $region38: #{neural_net_forward.1} parent=0
    _
  %s10 = ssub.s32 1, %s8
  %s11 = scalar_select 0, %s10, %s8
  %v12 = vstv %s6
  %13 = vst [vmem:[#allocation2] sm:$0x1] %v12
  // Predicated region
  $region2: #{neural_net_forward.1} parent=0 // pred_check
    _
  $region3: #{neural_net_forward.1} parent=0 // pred_check_branch
    %15 = sbr.rel (0) target = $region5
  $region4: #{neural_net_forward.1} parent=0 // pred_region
    _
  $region5: #{neural_net_forward.1} parent=0 // pred_fallthru
    _
  // Predicated region
  $region6: #{neural_net_forward.1} parent=0 // pred_check
    _
  $region7: #{neural_net_forward.1} parent=0 // pred_check_branch
    %17 = sbr.rel (0) target = $region9
  $region8: #{neural_net_forward.1} parent=0 // pred_region
    _
  $region9: #{neural_net_forward.1} parent=0 // pred_fallthru
    _
  // Predicated region
  $region10: #{neural_net_forward.1} parent=0 // pred_check
    _
  $region11: #{neural_net_forward.1} parent=0 // pred_check_branch
    %19 = sbr.rel (0) target = $region13
  $region12: #{neural_net_forward.1} parent=0 // pred_region
    _
  $region13: #{neural_net_forward.1} parent=0 // pred_fallthru
    _
  // Predicated region
  $region14: #{neural_net_forward.1} parent=0 // pred_check
    _
  $region15: #{neural_net_forward.1} parent=0 // pred_check_branch
    %21 = sbr.rel (0) target = $region17
  $region16: #{neural_net_forward.1} parent=0 // pred_region
    _
  $region17: #{neural_net_forward.1} parent=0 // pred_fallthru
    _
  // Predicated region
  $region18: #{neural_net_forward.1} parent=0 // pred_check
    _
  $region19: #{neural_net_forward.1} parent=0 // pred_check_branch
    %23 = sbr.rel (0) target = $region21
  $region20: #{neural_net_forward.1} parent=0 // pred_region
    _
  $region21: #{neural_net_forward.1} parent=0 // pred_fallthru
    _
  // Predicated region
  $region22: #{neural_net_forward.1} parent=0 // pred_check
    _
  $region23: #{neural_net_forward.1} parent=0 // pred_check_branch
    %25 = sbr.rel (0) target = $region25
  $region24: #{neural_net_forward.1} parent=0 // pred_region
    _
  $region25: #{neural_net_forward.1} parent=0 // pred_fallthru
    _
  // Predicated region
  $region26: #{neural_net_forward.1} parent=0 // pred_check
    _
  $region27: #{neural_net_forward.1} parent=0 // pred_check_branch
    %27 = sbr.rel (0) target = $region29
  $region28: #{neural_net_forward.1} parent=0 // pred_region
    _
  $region29: #{neural_net_forward.1} parent=0 // pred_fallthru
    _
  %v29 = vld [vmem:[%s0] sm:$0xff]
  %v30 = vpack.c.bf16 %v29, %v29
  %v31 = vld [vmem:[%s1] sm:$0xf]
  %v32 = vld [vmem:[%s1 + $0x4] sm:$0xf]
  %v33 = vld [vmem:[%s1 + $0x8] sm:$0xf]
  %v34 = vld [vmem:[%s1 + $0xc] sm:$0xf]
  %v35 = vld [vmem:[%s2] sm:$0x1]
  %v37 = vlaneseq
  %v38 = vshrl.u32 %v37, 7
  %v39 = vsub.s32 0, %v38
  %v40 = vrot.slane %v35, %v39
  %v46 = vunpack.c.l.b16 %v31
  %v47 = vunpack.c.l.b16 %v32
  %v48 = vunpack.c.l.b16 %v33
  %v49 = vunpack.c.l.b16 %v34
  %v50 = vpack.c.b16 %v47, %v46
  %v51 = vpack.c.b16 %v49, %v48
  %vm54 = vcmask 261120
  %v56 = vsel %vm54, %v30, 0
  %58 = vmatprep.subr.bf16.mxu0 0
  %59 = vmatpush1.bf16.msra.mxu0 %v50
  %60 = vmatprep.subr.bf16.mxu0 0
  %61 = vmatpush1.bf16.msra.mxu0 %v51
  %62 = vmatprep.subr.bf16.mxu0 0
  %63 = vmatpush1.bf16.msra.mxu0 0
  %64 = vmatprep.subr.bf16.mxu0 0
  %65 = vmatpush1.bf16.msra.mxu0 0
  %66 = vmatprep.subr.bf16.mxu0 0
  %67 = vmatpush1.bf16.msra.mxu0 0
  %68 = vmatprep.subr.bf16.mxu0 0
  %69 = vmatpush1.bf16.msra.mxu0 0
  %70 = vmatprep.subr.bf16.mxu0 0
  %71 = vmatpush1.bf16.msra.mxu0 0
  %72 = vmatprep.subr.bf16.mxu0 0
  %73 = vmatpush1.bf16.msra.mxu0 0
  %74 = vmatprep.subr.bf16.mxu0 0
  %75 = vmatpush1.bf16.msra.mxu0 0
  %76 = vmatprep.subr.bf16.mxu0 0
  %77 = vmatpush1.bf16.msra.mxu0 0
  %78 = vmatprep.subr.bf16.mxu0 0
  %79 = vmatpush1.bf16.msra.mxu0 0
  %80 = vmatprep.subr.bf16.mxu0 0
  %81 = vmatpush1.bf16.msra.mxu0 0
  %82 = vmatprep.subr.bf16.mxu0 0
  %83 = vmatpush1.bf16.msra.mxu0 0
  %84 = vmatprep.subr.bf16.mxu0 0
  %85 = vmatpush1.bf16.msra.mxu0 0
  %86 = vmatprep.subr.bf16.mxu0 0
  %87 = vmatpush1.bf16.msra.mxu0 0
  %88 = vmatprep.subr.bf16.mxu0 0
  %89 = vmatpush1.bf16.msra.mxu0 0
  %90 = vmatprep.mubr.bf16.mxu0 0
  %91 = vmatmul.mubr.bf16.gmra.mrb[0].mxu0 %v56
  %v92 = vpop.f32.mrb[0].mxu0
  %v93 = vadd.f32 %v40, %v92
  %v94 = vpop.f32.mrb[0].mxu0
  %v95 = vpop.f32.mrb[0].mxu0
  %v96 = vpop.f32.mrb[0].mxu0
  %97 = vdwg.mxu0
  %v98 = vmax.f32 %v93, 0.0
  %v99 = vpack.c.bf16 %v98, %v98
  %v100 = vld [vmem:[%s3] sm:$0xf]
  %v101 = vld [vmem:[%s3 + $0x4] sm:$0xf]
  %v102 = vld [vmem:[%s3 + $0x8] sm:$0xf]
  %v103 = vld [vmem:[%s3 + $0xc] sm:$0xf]
  %v104 = vld [vmem:[%s3 + $0x10] sm:$0xf]
  %v105 = vld [vmem:[%s3 + $0x14] sm:$0xf]
  %v106 = vld [vmem:[%s3 + $0x18] sm:$0xf]
  %v107 = vld [vmem:[%s3 + $0x1c] sm:$0xf]
  %v108 = vld [vmem:[%s3 + $0x20] sm:$0xf]
  %v109 = vld [vmem:[%s3 + $0x24] sm:$0xf]
  %v110 = vld [vmem:[%s3 + $0x28] sm:$0xf]
  %v111 = vld [vmem:[%s3 + $0x2c] sm:$0xf]
  %v112 = vld [vmem:[%s3 + $0x30] sm:$0xf]
  %v113 = vld [vmem:[%s3 + $0x34] sm:$0xf]
  %v114 = vld [vmem:[%s3 + $0x38] sm:$0xf]
  %v115 = vld [vmem:[%s3 + $0x3c] sm:$0xf]
  %v116 = vld [vmem:[%s4] sm:$0x1]
  %v118 = vlaneseq
  %v119 = vshrl.u32 %v118, 7
  %v120 = vsub.s32 0, %v119
  %v121 = vrot.slane %v116, %v120
  %v139 = vunpack.c.l.b16 %v100
  %v140 = vunpack.c.l.b16 %v101
  %v141 = vunpack.c.l.b16 %v102
  %v142 = vunpack.c.l.b16 %v103
  %v143 = vunpack.c.l.b16 %v104
  %v144 = vunpack.c.l.b16 %v105
  %v145 = vunpack.c.l.b16 %v106
  %v146 = vunpack.c.l.b16 %v107
  %v147 = vunpack.c.l.b16 %v108
  %v148 = vunpack.c.l.b16 %v109
  %v149 = vunpack.c.l.b16 %v110
  %v150 = vunpack.c.l.b16 %v111
  %v151 = vunpack.c.l.b16 %v112
  %v152 = vunpack.c.l.b16 %v113
  %v153 = vunpack.c.l.b16 %v114
  %v154 = vunpack.c.l.b16 %v115
  %v155 = vpack.c.b16 %v140, %v139
  %v156 = vpack.c.b16 %v142, %v141
  %v157 = vpack.c.b16 %v144, %v143
  %v158 = vpack.c.b16 %v146, %v145
  %v159 = vpack.c.b16 %v148, %v147
  %v160 = vpack.c.b16 %v150, %v149
  %v161 = vpack.c.b16 %v152, %v151
  %v162 = vpack.c.b16 %v154, %v153
  %171 = vmatprep.subr.bf16.mxu0 0
  %172 = vmatpush1.bf16.msra.mxu0 %v155
  %173 = vmatprep.subr.bf16.mxu0 0
  %174 = vmatpush1.bf16.msra.mxu0 %v156
  %175 = vmatprep.subr.bf16.mxu0 0
  %176 = vmatpush1.bf16.msra.mxu0 %v157
  %177 = vmatprep.subr.bf16.mxu0 0
  %178 = vmatpush1.bf16.msra.mxu0 %v158
  %179 = vmatprep.subr.bf16.mxu0 0
  %180 = vmatpush1.bf16.msra.mxu0 %v159
  %181 = vmatprep.subr.bf16.mxu0 0
  %182 = vmatpush1.bf16.msra.mxu0 %v160
  %183 = vmatprep.subr.bf16.mxu0 0
  %184 = vmatpush1.bf16.msra.mxu0 %v161
  %185 = vmatprep.subr.bf16.mxu0 0
  %186 = vmatpush1.bf16.msra.mxu0 %v162
  %187 = vmatprep.subr.bf16.mxu0 0
  %188 = vmatpush1.bf16.msra.mxu0 0
  %189 = vmatprep.subr.bf16.mxu0 0
  %190 = vmatpush1.bf16.msra.mxu0 0
  %191 = vmatprep.subr.bf16.mxu0 0
  %192 = vmatpush1.bf16.msra.mxu0 0
  %193 = vmatprep.subr.bf16.mxu0 0
  %194 = vmatpush1.bf16.msra.mxu0 0
  %195 = vmatprep.subr.bf16.mxu0 0
  %196 = vmatpush1.bf16.msra.mxu0 0
  %197 = vmatprep.subr.bf16.mxu0 0
  %198 = vmatpush1.bf16.msra.mxu0 0
  %199 = vmatprep.subr.bf16.mxu0 0
  %200 = vmatpush1.bf16.msra.mxu0 0
  %201 = vmatprep.subr.bf16.mxu0 0
  %202 = vmatpush1.bf16.msra.mxu0 0
  %203 = vmatprep.mubr.bf16.mxu0 0
  %204 = vmatmul.mubr.bf16.gmra.mrb[0].mxu0 %v99
  %v205 = vpop.f32.mrb[0].mxu0
  %v206 = vadd.f32 %v121, %v205
  %v207 = vpop.f32.mrb[0].mxu0
  %v208 = vpop.f32.mrb[0].mxu0
  %v209 = vpop.f32.mrb[0].mxu0
  %210 = vdwg.mxu0
  %v211 = vmax.f32 %v206, 0.0
  %v212 = vld [vmem:[%s5] sm:$0x1]
  %v214 = vlaneseq
  %v215 = vshrl.u32 %v214, 7
  %v216 = vsub.s32 0, %v215
  %v217 = vrot.slane %v212, %v216
  %v219 = vmul.f32 %v211, %v217
  %220 = vadd.xlane.f32.xlu0 %v219
  %v221 = vpop.xlane.xlu0 %220
  %v222 = vld [vmem:[#allocation2] sm:$0x1]
  %v224 = vlaneseq
  %v225 = vshrl.u32 %v224, 7
  %v226 = vsub.s32 0, %v225
  %v227 = vrot.slane %v222, %v226
  %v229 = vadd.f32 %v221, %v227
  %v230 = vxor.u32 %v229, 2147483648
  %v231 = vmul.f32 %v230, 1.442695
  %v232 = vpow.pop %v231
  %v233 = vadd.f32 %v232, 1.0
  %v234 = vrcp.pop %v233
  %v235 = vmul.f32 1.0, %v234
  %vm236 = vcmask 7168
  %237 = vst.msk [vmem:[%s7] sm:$0xff] %vm236, %v235
  // Predicated region
  $region30: #{neural_net_forward.1} parent=0 // pred_check
    _
  $region31: #{neural_net_forward.1} parent=0 // pred_check_branch
    %239 = sbr.rel (0) target = $region33
  $region32: #{neural_net_forward.1} parent=0 // pred_region
    _
  $region33: #{neural_net_forward.1} parent=0 // pred_fallthru
    _
  // Predicated region
  $region34: #{neural_net_forward.1} parent=0 // pred_check
    _
  $region35: #{neural_net_forward.1} parent=0 // pred_check_branch
    %241 = sbr.rel (0) target = $region37
  $region36: #{neural_net_forward.1} parent=0 // pred_region
    _
  $region37: #{neural_net_forward.1} parent=0 // pred_fallthru
    _

</llo_original>
